<compile_context>
chip_gen: v6e
topology: v6e:2x2x1
jax: 0.10.0
libtpu: 0.0.40
codegen_flags: <defaults>
</compile_context>

<pallas_src>
import functools
from typing import Optional

import jax
import jax.numpy as jnp
from jax.experimental import pallas as pl
from jax.experimental.pallas import tpu as pltpu


def _focal_per_pixel(x, tgt, fac, valid, gamma):
    """x: (C, T) f32 logits, tgt: (1, T) int32, fac: (C, 1) f32,
    valid: (1, T) bool lane predicate (False on clipped/garbage lanes).

    Returns (loss_t, mask): loss_t (1, T) per-pixel focal loss at the target
    class (0 on invalid lanes), mask (C, T) bool target indicator & valid.
    """
    C, T = x.shape
    # single-exp stable softmax over the class (sublane) axis
    m = jnp.max(x, axis=0, keepdims=True)                # (1, T)
    z = x - m
    e = jnp.exp(z)                                        # one exp per element
    s = jnp.sum(e, axis=0, keepdims=True)                 # (1, T)

    cls = jax.lax.broadcasted_iota(jnp.int32, (C, T), 0)
    mask = (cls == tgt) & valid                           # (C, T) bool

    # gather the target class (C-way sum over the small sublane axis)
    z_t = jnp.sum(jnp.where(mask, z, 0.0), axis=0, keepdims=True)      # (1, T)
    e_t = jnp.sum(jnp.where(mask, e, 0.0), axis=0, keepdims=True)      # (1, T)
    fac_t = jnp.sum(jnp.where(mask, fac, 0.0), axis=0, keepdims=True)  # (1, T)

    logp_t = z_t - jnp.log(s)                             # log_softmax at target
    p_t = e_t / s                                         # softmax prob at target
    q = jnp.maximum(1.0 - p_t, 0.0)                       # guard tiny negatives

    if gamma == 2.0:                                      # common case: multiplies
        focal_w = q * q
    elif gamma == 1.0:
        focal_w = q
    elif gamma == 0.0:
        focal_w = jnp.ones_like(q)
    else:
        focal_w = jnp.power(q, gamma)                     # 0**gamma == 0 for gamma > 0

    # invalid lanes can carry inf/NaN from garbage logits -> force them to 0
    loss_t = jnp.where(valid, -fac_t * focal_w * logp_t, 0.0)          # (1, T)
    return loss_t, mask


def _lane_valid(lane_tile, total_l):
    l = pl.program_id(1)
    lane = jax.lax.broadcasted_iota(jnp.int32, (1, lane_tile), 1)
    return (l * lane_tile + lane) < total_l


def _focal_kernel_none(logits_ref, target_ref, fac_ref, loss_ref, *,
                       gamma, lane_tile, total_l):
    valid = _lane_valid(lane_tile, total_l)
    loss_t, mask = _focal_per_pixel(
        logits_ref[...].astype(jnp.float32), target_ref[...], fac_ref[...],
        valid, gamma)
    # scatter the per-pixel loss back to its target class row
    loss_ref[...] = jnp.where(mask, loss_t, 0.0).astype(loss_ref.dtype)


def _focal_kernel_reduce(logits_ref, target_ref, fac_ref, partial_ref, *,
                         gamma, lane_tile, total_l):
    valid = _lane_valid(lane_tile, total_l)
    loss_t, _ = _focal_per_pixel(
        logits_ref[...].astype(jnp.float32), target_ref[...], fac_ref[...],
        valid, gamma)
    tile_sum = jnp.sum(loss_t)                            # one small reduce per tile
    out_lane = jax.lax.broadcasted_iota(jnp.int32, partial_ref.shape,
                                        len(partial_ref.shape) - 1)
    # per-tile partial into lane 0 of a 128-wide block (lane-dense store)
    partial_ref[...] = jnp.where(out_lane == 0, tile_sum, 0.0)


def _pick_lane_tile(C, L, N, itemsize, reduction):
    """Lane-tile heuristic: ~1.5 MiB logits block, VMEM-budgeted, grid >= 4."""
    # target ~1.5 MiB per logits block (f32-equivalent), clamp [1024, 32768]
    tile = (int(1.5 * 1024 * 1024) // (4 * C) // 128) * 128
    tile = max(1024, min(tile, 32768))
    # don't exceed what L needs (single block covers everything)
    tile = min(tile, int(pl.cdiv(L, 128)) * 128)
    tile = max(tile, 128)

    # VMEM budget: double-buffered inputs (+ full loss block for 'none');
    # keep <= ~24 MiB so it is comfortable on v7x (64 MiB physical VMEM).
    def vmem_need(t):
        in_b = C * t * max(itemsize, 4) + t * 4
        out_b = C * t * max(itemsize, 4) if reduction == "none" else 128 * 4
        return 2 * (in_b + out_b) + C * 4

    while tile > 128 and vmem_need(tile) > 24 * 1024 * 1024:
        tile = max(128, ((tile // 2) // 128) * 128)

    # keep enough grid steps to shard across v7x's 2 TensorCores
    min_steps = 4
    while tile > 128 and N * int(pl.cdiv(L, tile)) < min_steps:
        tile = max(128, ((tile // 2) // 128) * 128)
    return tile


def focal_loss_pallas(pred, target, alpha: Optional[float], gamma: float = 2.0,
                      reduction: str = "none", weight=None, *,
                      lane_tile: Optional[int] = None):
    """pred: (N, C, *spatial) float, target: (N, *spatial) int."""
    if pred.ndim < 2:
        raise ValueError("pred must have shape (N, C, *)")
    N, C = int(pred.shape[0]), int(pred.shape[1])
    spatial = pred.shape[2:]
    L = 1
    for s in spatial:
        L *= int(s)

    # native layout: contiguous reshapes only, keep pred's native dtype
    logits = pred.reshape(N, C, L)
    tgt = target.reshape(N, 1, L).astype(jnp.int32)

    itemsize = jnp.dtype(pred.dtype).itemsize
    if lane_tile is None:
        lane_tile = _pick_lane_tile(C, L, N, itemsize, reduction)
    else:
        lane_tile = max(128, (int(lane_tile) // 128) * 128)
        lane_tile = min(lane_tile, int(pl.cdiv(L, 128)) * 128)

    num_l_tiles = int(pl.cdiv(L, lane_tile))
    grid = (N, num_l_tiles)

    # per-class factor: alpha_fac * weight, classes on the sublane axis -> (C, 1)
    if alpha is not None:
        alpha_fac = jnp.array([1.0 - alpha] + [alpha] * (C - 1), dtype=jnp.float32)
    else:
        alpha_fac = jnp.ones((C,), dtype=jnp.float32)
    w = jnp.ones((C,), jnp.float32) if weight is None else jnp.asarray(weight, jnp.float32)
    fac = (alpha_fac * w).reshape(C, 1)

    in_specs = [
        pl.BlockSpec((None, C, lane_tile), lambda n, l: (n, 0, l)),   # logits tile (C, T)
        pl.BlockSpec((None, 1, lane_tile), lambda n, l: (n, 0, l)),   # target tile (1, T)
        pl.BlockSpec((C, 1), lambda n, l: (0, 0)),                    # per-class factor
    ]
    # 32 MiB scoped VMEM keeps headroom on every generation (v7x: 64 MiB physical)
    cparams = pltpu.CompilerParams(
        dimension_semantics=("parallel", "parallel"),
        vmem_limit_bytes=32 * 1024 * 1024,
    )

    if reduction == "none":
        loss = pl.pallas_call(
            functools.partial(_focal_kernel_none, gamma=float(gamma),
                              lane_tile=lane_tile, total_l=L),
            out_shape=jax.ShapeDtypeStruct((N, C, L), pred.dtype),
            grid_spec=pltpu.PrefetchScalarGridSpec(
                num_scalar_prefetch=0,
                grid=grid,
                in_specs=in_specs,
                out_specs=pl.BlockSpec((None, C, lane_tile), lambda n, l: (n, 0, l)),
            ),
            compiler_params=cparams,
        )(logits, tgt, fac)
        return loss.reshape(pred.shape)

    elif reduction in ("sum", "mean"):
        # no full loss tensor is written for sum/mean: only tiny per-tile partials
        partials = pl.pallas_call(
            functools.partial(_focal_kernel_reduce, gamma=float(gamma),
                              lane_tile=lane_tile, total_l=L),
            out_shape=jax.ShapeDtypeStruct((N, 1, num_l_tiles * 128), jnp.float32),
            grid_spec=pltpu.PrefetchScalarGridSpec(
                num_scalar_prefetch=0,
                grid=grid,
                in_specs=in_specs,
                out_specs=pl.BlockSpec((None, 1, 128), lambda n, l: (n, 0, l)),
            ),
            compiler_params=cparams,
        )(logits, tgt, fac)
        total = jnp.sum(partials)
        if reduction == "sum":
            return total.astype(pred.dtype)
        # torch.mean(loss_tmp) divides by N * C * prod(spatial)
        denom = N * C * L
        return (total / jnp.float32(denom)).astype(pred.dtype)

    else:
        raise NotImplementedError(f"Invalid reduction mode: {reduction}")


class FocalLoss:
    """JAX/Pallas port of kornia FocalLoss (forward pass only)."""

    def __init__(self, alpha: Optional[float], gamma: float = 2.0,
                 reduction: str = "none", weight=None):
        self.alpha = alpha
        self.gamma = gamma
        self.reduction = reduction
        self.weight = weight

    def __call__(self, pred, target):
        return focal_loss_pallas(pred, target, self.alpha, self.gamma,
                                 self.reduction, self.weight)


def _focal_loss_ref(pred, target, alpha, gamma, reduction, weight):
    C = pred.shape[1]
    logp = jax.nn.log_softmax(pred, axis=1)
    p = jnp.exp(logp)
    one_hot = jax.nn.one_hot(target, C, axis=1, dtype=pred.dtype)
    loss = -jnp.power(1.0 - p, gamma) * logp * one_hot
    bshape = (1, C) + (1,) * (pred.ndim - 2)
    if alpha is not None:
        af = jnp.array([1.0 - alpha] + [alpha] * (C - 1), pred.dtype).reshape(bshape)
        loss = af * loss
    if weight is not None:
        loss = weight.reshape(bshape) * loss
    if reduction == "mean":
        return jnp.mean(loss)
    if reduction == "sum":
        return jnp.sum(loss)
    return loss


if __name__ == "__main__":
    key = jax.random.PRNGKey(0)
    k1, k2, k3, k4 = jax.random.split(key, 4)

    # --- segmentation-style inputs (lane-divisible L) ---
    N, C, H, W = 2, 4, 16, 16
    pred = jax.random.normal(k1, (N, C, H, W), dtype=jnp.float32)
    target = jax.random.randint(k2, (N, H, W), 0, C, dtype=jnp.int32)
    class_weight = (jnp.arange(C, dtype=jnp.float32) + 1.0) / C

    # reduction='mean' (with alpha + class weights)
    crit_mean = FocalLoss(alpha=0.5, gamma=2.0, reduction="mean", weight=class_weight)
    out_mean = jax.block_until_ready(crit_mean(pred, target))
    ref_mean = _focal_loss_ref(pred, target, 0.5, 2.0, "mean", class_weight)
    assert jnp.allclose(out_mean, ref_mean, atol=1e-5, rtol=1e-4), (out_mean, ref_mean)

    # reduction='sum'
    crit_sum = FocalLoss(alpha=0.5, gamma=2.0, reduction="sum", weight=class_weight)
    out_sum = jax.block_until_ready(crit_sum(pred, target))
    ref_sum = _focal_loss_ref(pred, target, 0.5, 2.0, "sum", class_weight)
    assert jnp.allclose(out_sum, ref_sum, atol=1e-4, rtol=1e-4), (out_sum, ref_sum)

    # reduction='none' (module default)
    crit_none = FocalLoss(alpha=0.5, gamma=2.0, reduction="none", weight=None)
    out_none = jax.block_until_ready(crit_none(pred, target))
    ref_none = _focal_loss_ref(pred, target, 0.5, 2.0, "none", None)
    assert out_none.shape == (N, C, H, W)
    assert jnp.allclose(out_none, ref_none, atol=1e-5, rtol=1e-4)

    # --- odd spatial shape (exercises the clipped last block + lane mask) ---
    C2 = 5
    pred2 = jax.random.normal(k3, (1, C2, 3, 5), dtype=jnp.float32)
    target2 = jax.random.randint(k4, (1, 3, 5), 0, C2, dtype=jnp.int32)

    out2_mean = jax.block_until_ready(
        FocalLoss(alpha=0.5, gamma=2.0, reduction="mean")(pred2, target2))
    ref2_mean = _focal_loss_ref(pred2, target2, 0.5, 2.0, "mean", None)
    assert jnp.allclose(out2_mean, ref2_mean, atol=1e-5, rtol=1e-4), (out2_mean, ref2_mean)

    out2_none = jax.block_until_ready(
        FocalLoss(alpha=None, gamma=2.0, reduction="none")(pred2, target2))
    ref2_none = _focal_loss_ref(pred2, target2, None, 2.0, "none", None)
    assert out2_none.shape == (1, C2, 3, 5)
    assert jnp.allclose(out2_none, ref2_none, atol=1e-5, rtol=1e-4)

    print("KERNEL_OK")
</pallas_src>

<mosaic_0001>
module attributes {stable_mosaic.version = 11 : i64} {
  func.func @_focal_kernel_reduce(%arg0: i32, %arg1: i32, %arg2: memref<1x4x128xf32, #tpu.memory_space<vmem>>, %arg3: memref<1x1x128xi32, #tpu.memory_space<vmem>>, %arg4: memref<4x1xf32, #tpu.memory_space<vmem>>, %arg5: memref<1x1x128xf32, #tpu.memory_space<vmem>>) attributes {dimension_semantics = [#tpu.dimension_semantics<parallel>, #tpu.dimension_semantics<parallel>], iteration_bounds = array<i64: 2, 2>, scalar_prefetch = 0 : i64, scratch_operands = 0 : i64, tpu.core_type = #tpu.core_type<tc>, window_params = [{transform_indices = @transform_0, window_bounds = array<i64: 1, 4, 128>}, {transform_indices = @transform_1, window_bounds = array<i64: 1, 1, 128>}, {pipeline_mode = #tpu.pipeline_mode<synchronous>, transform_indices = @transform_2, window_bounds = array<i64: 4, 1>}, {transform_indices = @transform_3, window_bounds = array<i64: 1, 1, 128>}]} {
    %0 = tpu.iota {dimensions = array<i32: 1>} : vector<1x128xi32>
    %c128_i32 = arith.constant 128 : i32
    %1 = arith.muli %arg1, %c128_i32 : i32
    %2 = vector.broadcast %1 : i32 to vector<1x128xi32>
    %3 = arith.addi %2, %0 : vector<1x128xi32>
    %c256_i32 = arith.constant 256 : i32
    %4 = vector.broadcast %c256_i32 : i32 to vector<1x128xi32>
    %5 = arith.cmpi slt, %3, %4 : vector<1x128xi32>
    %c0 = arith.constant 0 : index
    %c0_0 = arith.constant 0 : index
    %c0_1 = arith.constant 0 : index
    %6 = vector.load %arg2[%c0, %c0_0, %c0_1] : memref<1x4x128xf32, #tpu.memory_space<vmem>>, vector<1x4x128xf32>
    %7 = vector.shape_cast %6 : vector<1x4x128xf32> to vector<4x128xf32>
    %c0_2 = arith.constant 0 : index
    %c0_3 = arith.constant 0 : index
    %c0_4 = arith.constant 0 : index
    %8 = vector.load %arg3[%c0_2, %c0_3, %c0_4] : memref<1x1x128xi32, #tpu.memory_space<vmem>>, vector<1x1x128xi32>
    %9 = vector.shape_cast %8 : vector<1x1x128xi32> to vector<1x128xi32>
    %c0_5 = arith.constant 0 : index
    %c0_6 = arith.constant 0 : index
    %10 = vector.load %arg4[%c0_5, %c0_6] : memref<4x1xf32, #tpu.memory_space<vmem>>, vector<4x1xf32>
    %cst = arith.constant dense<0xFF800000> : vector<128xf32>
    %11 = vector.multi_reduction <maximumf>, %7, %cst [0] : vector<4x128xf32> to vector<128xf32>
    %12 = vector.shape_cast %11 : vector<128xf32> to vector<1x128xf32>
    %13 = vector.broadcast %12 : vector<1x128xf32> to vector<4x128xf32>
    %14 = arith.subf %7, %13 : vector<4x128xf32>
    %15 = math.exp %14 : vector<4x128xf32>
    %cst_7 = arith.constant dense<0.000000e+00> : vector<128xf32>
    %16 = vector.multi_reduction <add>, %15, %cst_7 [0] : vector<4x128xf32> to vector<128xf32>
    %17 = vector.shape_cast %16 : vector<128xf32> to vector<1x128xf32>
    %18 = tpu.iota {dimensions = array<i32: 0>} : vector<4x128xi32>
    %19 = vector.broadcast %9 : vector<1x128xi32> to vector<4x128xi32>
    %20 = arith.cmpi eq, %18, %19 : vector<4x128xi32>
    %21 = vector.broadcast %5 : vector<1x128xi1> to vector<4x128xi1>
    %22 = arith.andi %20, %21 : vector<4x128xi1>
    %cst_8 = arith.constant 0.000000e+00 : f32
    %23 = vector.broadcast %cst_8 : f32 to vector<4x128xf32>
    %24 = arith.select %22, %14, %23 : vector<4x128xi1>, vector<4x128xf32>
    %cst_9 = arith.constant dense<0.000000e+00> : vector<128xf32>
    %25 = vector.multi_reduction <add>, %24, %cst_9 [0] : vector<4x128xf32> to vector<128xf32>
    %26 = vector.shape_cast %25 : vector<128xf32> to vector<1x128xf32>
    %cst_10 = arith.constant 0.000000e+00 : f32
    %27 = vector.broadcast %cst_10 : f32 to vector<4x128xf32>
    %28 = arith.select %22, %15, %27 : vector<4x128xi1>, vector<4x128xf32>
    %cst_11 = arith.constant dense<0.000000e+00> : vector<128xf32>
    %29 = vector.multi_reduction <add>, %28, %cst_11 [0] : vector<4x128xf32> to vector<128xf32>
    %30 = vector.shape_cast %29 : vector<128xf32> to vector<1x128xf32>
    %cst_12 = arith.constant 0.000000e+00 : f32
    %31 = vector.shape_cast %10 : vector<4x1xf32> to vector<4x1xf32>
    %32 = vector.broadcast %31 : vector<4x1xf32> to vector<4x128xf32>
    %33 = vector.broadcast %cst_12 : f32 to vector<4x128xf32>
    %34 = arith.select %22, %32, %33 : vector<4x128xi1>, vector<4x128xf32>
    %cst_13 = arith.constant dense<0.000000e+00> : vector<128xf32>
    %35 = vector.multi_reduction <add>, %34, %cst_13 [0] : vector<4x128xf32> to vector<128xf32>
    %36 = vector.shape_cast %35 : vector<128xf32> to vector<1x128xf32>
    %37 = math.log %17 : vector<1x128xf32>
    %38 = arith.subf %26, %37 : vector<1x128xf32>
    %39 = arith.divf %30, %17 : vector<1x128xf32>
    %cst_14 = arith.constant 1.000000e+00 : f32
    %40 = vector.broadcast %cst_14 : f32 to vector<1x128xf32>
    %41 = arith.subf %40, %39 : vector<1x128xf32>
    %cst_15 = arith.constant 0.000000e+00 : f32
    %42 = vector.broadcast %cst_15 : f32 to vector<1x128xf32>
    %43 = arith.maximumf %41, %42 : vector<1x128xf32>
    %44 = arith.mulf %43, %43 : vector<1x128xf32>
    %cst_16 = arith.constant 0.000000e+00 : f32
    %45 = vector.broadcast %cst_16 : f32 to vector<1x128xf32>
    %46 = arith.subf %45, %36 : vector<1x128xf32>
    %47 = arith.mulf %46, %44 : vector<1x128xf32>
    %48 = arith.mulf %47, %38 : vector<1x128xf32>
    %cst_17 = arith.constant 0.000000e+00 : f32
    %49 = vector.broadcast %cst_17 : f32 to vector<1x128xf32>
    %50 = arith.select %5, %48, %49 : vector<1x128xi1>, vector<1x128xf32>
    %51 = vector.shape_cast %50 : vector<1x128xf32> to vector<1x1x128xf32>
    %cst_18 = arith.constant dense<0.000000e+00> : vector<1xf32>
    %52 = vector.multi_reduction <add>, %51, %cst_18 [1, 2] : vector<1x1x128xf32> to vector<1xf32>
    %53 = vector.shape_cast %52 : vector<1xf32> to vector<1x1x1xf32>
    %54 = vector.extract %53[0, 0, 0] : f32 from vector<1x1x1xf32>
    %55 = tpu.iota {dimensions = array<i32: 1>} : vector<1x128xi32>
    %c0_i32 = arith.constant 0 : i32
    %56 = vector.broadcast %c0_i32 : i32 to vector<1x128xi32>
    %57 = arith.cmpi eq, %55, %56 : vector<1x128xi32>
    %cst_19 = arith.constant 0.000000e+00 : f32
    %58 = vector.broadcast %54 : f32 to vector<1x128xf32>
    %59 = vector.broadcast %cst_19 : f32 to vector<1x128xf32>
    %60 = arith.select %57, %58, %59 : vector<1x128xi1>, vector<1x128xf32>
    %c0_20 = arith.constant 0 : index
    %c0_21 = arith.constant 0 : index
    %c0_22 = arith.constant 0 : index
    %61 = vector.load %arg5[%c0_20, %c0_21, %c0_22] : memref<1x1x128xf32, #tpu.memory_space<vmem>>, vector<1x1x128xf32>
    %62 = vector.shape_cast %61 : vector<1x1x128xf32> to vector<1x128xf32>
    %63 = vector.shape_cast %60 : vector<1x128xf32> to vector<1x1x128xf32>
    tpu.vector_store %arg5[%c0_20, %c0_21, %c0_22], %63 {strides = array<i32>} : memref<1x1x128xf32, #tpu.memory_space<vmem>>, vector<1x1x128xf32>,
    return
  }
  func.func @transform_0(%arg0: i32, %arg1: i32) -> (i32, i32, i32) {
    %c0_i32 = arith.constant 0 : i32
    %c0_i32_0 = arith.constant 0 : i32
    return %arg0, %c0_i32, %arg1 : i32, i32, i32
  }
  func.func @transform_1(%arg0: i32, %arg1: i32) -> (i32, i32, i32) {
    %c0_i32 = arith.constant 0 : i32
    %c0_i32_0 = arith.constant 0 : i32
    return %arg0, %c0_i32, %arg1 : i32, i32, i32
  }
  func.func @transform_2(%arg0: i32, %arg1: i32) -> (i32, i32) {
    %c0_i32 = arith.constant 0 : i32
    %c0_i32_0 = arith.constant 0 : i32
    %c0_i32_1 = arith.constant 0 : i32
    return %c0_i32, %c0_i32_0 : i32, i32
  }
  func.func @transform_3(%arg0: i32, %arg1: i32) -> (i32, i32, i32) {
    %c0_i32 = arith.constant 0 : i32
    %c0_i32_0 = arith.constant 0 : i32
    return %arg0, %c0_i32, %arg1 : i32, i32, i32
  }
}

</mosaic_0001>

<llo_original>
// kernel: tpu_custom_call.1
$region0: #{tpu_custom_call.1}
  #allocation0 [shape = 'u32[]', space=smem, size = 0x4, offset = 0x4, fixed_abs, tag = 'smem constant byte address 0x4 - core index']
  #allocation1 [shape = 'u32[144,128]{1,0:T(1,128)}', space=vmem, size = 0x12000, scoped, tag = 'internal scratch']
  %s0 = inlined_call_operand.hbm [shape: f32[2,4,256], index: 0, kind: input, shape index: {}]
  %s1 = inlined_call_operand.vmem [shape: s32[2,1,256], index: 1, kind: input, shape index: {}]
  %s2 = inlined_call_operand.vmem [shape: f32[4,1], index: 2, kind: input, shape index: {}]
  %s3 = inlined_call_operand.hbm [shape: f32[2,1,256], index: 3, kind: output, shape index: {}]
  %s4 = sld [smem:[#allocation0]]
  $region49: #{tpu_custom_call.1} parent=0
    _
  %s6 = ssub.s32 1, %s4
  %s7 = scalar_select 0, %s6, %s4
  $region1: #{tpu_custom_call.1} parent=0
    #allocation2 [shape = 'u8[4096]{0}', space=vmem, size = 0x1000, scoped, tag = 'input window, operand 0']
    #allocation3 [shape = 's32[2]{0}', space=sflag, size = 0x8, scoped, tag = 'scoped memory for tpu_custom_call.1']
    #allocation4 [shape = 's32[2]{0}', space=sflag, size = 0x8, scoped, tag = 'scoped memory for tpu_custom_call.1']
    #allocation5 [shape = 'u8[1024]{0}', space=vmem, size = 0x400, scoped, tag = 'output window, operand 0']
    %8 = vsyncpa [#allocation3], 0
    %s9 = scalar_lea.sflag [#allocation3], 1
    %10 = vsyncpa %s9, 0
    %11 = vsyncpa [#allocation4], 0
    %s12 = scalar_lea.sflag [#allocation4], 1
    %13 = vsyncpa %s12, 0
    loop: start=0, step=1, limit=6
    $region2: #{tpu_custom_call.1} parent=1 // loop_pre_header
      _
    $region3: #{tpu_custom_call.1} parent=1 // loop_header
      %s15 = sphi 0, %s19
      %p16 = scmp.ge.s32.totalorder %s15, 6
      %s22 = sphi 0, %s34
      %s23 = sphi 0, %s30
      %s24 = sphi 0, %s22
      %s25 = sphi 0, %s23
      %s26 = sphi 0, %s24
      %s27 = sphi 0, %s25
      %s39 = sphi 0, %s41
      %s42 = sphi 0, %s39
      %s43 = sphi 0, %s42
      %s59 = sphi 0, %s43
      %s67 = sphi 0, %s69
      %s70 = sphi 0, %s67
      %s71 = sphi 0, %s70
      %s87 = sphi 0, %s71
      %s91 = sphi 0, %s91
      %s93 = sphi 0, %s91
      %s94 = sphi 0, %s93
      %s108 = sphi 0, %s94
      %s116 = sphi 0, %s118
      %s119 = sphi 0, %s116
      %s120 = sphi 0, %s119
      %s136 = sphi 0, %s120
    $region4: #{tpu_custom_call.1} parent=1 // loop_header_branch
      %18 = sbr.rel (%p16) target = $region8
    $region5: #{tpu_custom_call.1} parent=1 // loop_body
      %s20 = ssub.s32 %s15, 1
      %s21 = ssub.s32 %s15, 2
      %s28 = sadd.s32 1, %s23
      %p29 = scmp.ge.s32.totalorder %s28, 2
      %s30 = scalar_select %p29, 0, %s28
      %s31 = sadd.s32 1, %s22
      %s32 = scalar_select %p29, %s31, %s22
      %p33 = scmp.ge.s32.totalorder %s32, 2
      %s34 = scalar_select %p33, 0, %s32
      %s35 = ssub.s32 %s22, %s34
      %s36 = ssub.s32 %s23, %s30
      %s37 = sor.u32 %s35, %s36
      %p38 = scmp.eq.s32.totalorder %s37, 0
      %s40 = sadd.s32 %s39, 1
      %s41 = scalar_select %p38, %s39, %s40
      %p44 = pneg %p38
      %p45 = scmp.eq.s32.totalorder %s15, 3
      %p46 = por %p44, %p45
      %p47 = scmp.ne.s32.totalorder %s39, %s42
      %p48 = scmp.eq.s32.totalorder %s15, 0
      %p49 = por %p47, %p48
      %p50 = scmp.ne.s32.totalorder %s39, %s42
      %p51 = scmp.eq.s32.totalorder %s20, 3
      %p52 = por %p50, %p51
      %p53 = scmp.ne.s32.totalorder %s42, %s43
      %p54 = scmp.eq.s32.totalorder %s20, 0
      %p55 = por %p53, %p54
      %p56 = scmp.ne.s32.totalorder %s42, %s43
      %p57 = scmp.eq.s32.totalorder %s21, 3
      %p58 = por %p56, %p57
      %p60 = scmp.ne.s32.totalorder %s43, %s59
      %p61 = scmp.eq.s32.totalorder %s21, 0
      %p62 = por %p60, %p61
      %s63 = ssub.s32 %s22, %s34
      %s64 = ssub.s32 %s23, %s30
      %s65 = sor.u32 %s63, %s64
      %p66 = scmp.eq.s32.totalorder %s65, 0
      %s68 = sadd.s32 %s67, 1
      %s69 = scalar_select %p66, %s67, %s68
      %p72 = pneg %p66
      %p73 = scmp.eq.s32.totalorder %s15, 3
      %p74 = por %p72, %p73
      %p75 = scmp.ne.s32.totalorder %s67, %s70
      %p76 = scmp.eq.s32.totalorder %s15, 0
      %p77 = por %p75, %p76
      %p78 = scmp.ne.s32.totalorder %s67, %s70
      %p79 = scmp.eq.s32.totalorder %s20, 3
      %p80 = por %p78, %p79
      %p81 = scmp.ne.s32.totalorder %s70, %s71
      %p82 = scmp.eq.s32.totalorder %s20, 0
      %p83 = por %p81, %p82
      %p84 = scmp.ne.s32.totalorder %s70, %s71
      %p85 = scmp.eq.s32.totalorder %s21, 3
      %p86 = por %p84, %p85
      %p88 = scmp.ne.s32.totalorder %s71, %s87
      %p89 = scmp.eq.s32.totalorder %s21, 0
      %p90 = por %p88, %p89
      %s92 = sadd.s32 %s91, 1
      %p95 = scmp.eq.s32.totalorder %s15, 3
      %p96 = scmp.ne.s32.totalorder %s91, %s93
      %p97 = scmp.eq.s32.totalorder %s15, 0
      %p98 = por %p96, %p97
      %p99 = scmp.ne.s32.totalorder %s91, %s93
      %p100 = scmp.eq.s32.totalorder %s20, 3
      %p101 = por %p99, %p100
      %p102 = scmp.ne.s32.totalorder %s93, %s94
      %p103 = scmp.eq.s32.totalorder %s20, 0
      %p104 = por %p102, %p103
      %p105 = scmp.ne.s32.totalorder %s93, %s94
      %p106 = scmp.eq.s32.totalorder %s21, 3
      %p107 = por %p105, %p106
      %p109 = scmp.ne.s32.totalorder %s94, %s108
      %p110 = scmp.eq.s32.totalorder %s21, 0
      %p111 = por %p109, %p110
      %s112 = ssub.s32 %s22, %s34
      %s113 = ssub.s32 %s23, %s30
      %s114 = sor.u32 %s112, %s113
      %p115 = scmp.eq.s32.totalorder %s114, 0
      %s117 = sadd.s32 %s116, 1
      %s118 = scalar_select %p115, %s116, %s117
      %p121 = pneg %p115
      %p122 = scmp.eq.s32.totalorder %s15, 3
      %p123 = por %p121, %p122
      %p124 = scmp.ne.s32.totalorder %s116, %s119
      %p125 = scmp.eq.s32.totalorder %s15, 0
      %p126 = por %p124, %p125
      %p127 = scmp.ne.s32.totalorder %s116, %s119
      %p128 = scmp.eq.s32.totalorder %s20, 3
      %p129 = por %p127, %p128
      %p130 = scmp.ne.s32.totalorder %s119, %s120
      %p131 = scmp.eq.s32.totalorder %s20, 0
      %p132 = por %p130, %p131
      %p133 = scmp.ne.s32.totalorder %s119, %s120
      %p134 = scmp.eq.s32.totalorder %s21, 3
      %p135 = por %p133, %p134
      %p137 = scmp.ne.s32.totalorder %s120, %s136
      %p138 = scmp.eq.s32.totalorder %s21, 0
      %p139 = por %p137, %p138
      %p140 = scmp.le.s32.totalorder 1, %s15
      %p141 = scmp.lt.s32.totalorder %s15, 5
      %p142 = pnand %p140, %p141
      %p143 = pneg %p142
      // Predicated region
      $region9: #{tpu_custom_call.1} parent=5 // pred_check
        _
      $region10: #{tpu_custom_call.1} parent=5 // pred_check_branch
        %145 = sbr.rel (%p142) target = $region12
      $region11: #{tpu_custom_call.1} parent=5 // pred_region
        %s146 = ssub.s32 %s15, 1
        // Predicated region
        $region13: #{tpu_custom_call.1} parent=11 // pred_check
          %p147 = pneg %p104
        $region14: #{tpu_custom_call.1} parent=11 // pred_check_branch
          %149 = sbr.rel (%p147) target = $region16
        $region15: #{tpu_custom_call.1} parent=11 // pred_region
          _
        $region16: #{tpu_custom_call.1} parent=11 // pred_fallthru
          _
      $region12: #{tpu_custom_call.1} parent=5 // pred_fallthru
        _
      %p150 = scmp.lt.s32.totalorder %s15, 4
      // Predicated region
      $region17: #{tpu_custom_call.1} parent=5 // pred_check
        %p151 = pneg %p150
      $region18: #{tpu_custom_call.1} parent=5 // pred_check_branch
        %153 = sbr.rel (%p151) target = $region20
      $region19: #{tpu_custom_call.1} parent=5 // pred_region
        // Predicated region
        $region21: #{tpu_custom_call.1} parent=19 // pred_check
          %p154 = pneg %p49
        $region22: #{tpu_custom_call.1} parent=19 // pred_check_branch
          %156 = sbr.rel (%p154) target = $region24
        $region23: #{tpu_custom_call.1} parent=19 // pred_region
          %s157 = sand.u32 %s39, 1
          %s158 = scalar_lea.sflag [#allocation3], %s157
          %s159 = sand.u32 %s39, 1
          %s160 = smul.addr %s159, 4
          %s161 = scalar_lea.vmem [#allocation2], %s160
          %s163 = ssub.s32 64, 64
          %164 = vsyncadd %s158, %s163
          %s165 = smul.addr %s22, 2
          %s166 = sadd.s32 %s23, %s165
          %s167 = smul.addr %s166, 64
          %s168 = scalar_lea.hbm %s0, %s167
          %s170 = sshll.u32 %s161, 4
          %s171 = int_to_ptr.vmem [resolvable:$true] %s170
          %173 = dma.hbm_to_vmem [thread:$0]  %s168, 64, %s171, %s158
        $region24: #{tpu_custom_call.1} parent=19 // pred_fallthru
          _
        // Predicated region
        $region25: #{tpu_custom_call.1} parent=19 // pred_check
          %p174 = pneg %p77
        $region26: #{tpu_custom_call.1} parent=19 // pred_check_branch
          %176 = sbr.rel (%p174) target = $region28
        $region27: #{tpu_custom_call.1} parent=19 // pred_region
          %p177 = scmp.lt.s32.totalorder %s22, 1
          %s178 = scalar_select %p177, %s22, 1
          %p179 = scmp.lt.s32.totalorder %s23, 1
          %s180 = scalar_select %p179, %s23, 1
          %s181 = smul.addr %s178, 2
          %s182 = sadd.s32 %s180, %s181
          %s183 = scalar_lea.vmem %s1, %s182
        $region28: #{tpu_custom_call.1} parent=19 // pred_fallthru
          _
      $region20: #{tpu_custom_call.1} parent=5 // pred_fallthru
        _
      %p184 = scmp.le.s32.totalorder 1, %s15
      %p185 = scmp.lt.s32.totalorder %s15, 5
      %p186 = pnand %p184, %p185
      %p187 = pneg %p186
      // Predicated region
      $region29: #{tpu_custom_call.1} parent=5 // pred_check
        _
      $region30: #{tpu_custom_call.1} parent=5 // pred_check_branch
        %189 = sbr.rel (%p186) target = $region32
      $region31: #{tpu_custom_call.1} parent=5 // pred_region
        %s190 = ssub.s32 %s15, 1
        %s191 = sand.u32 %s42, 1
        %s192 = scalar_lea.sflag [#allocation3], %s191
        %s193 = sand.u32 %s42, 1
        %s194 = smul.addr %s193, 4
        %s195 = scalar_lea.vmem [#allocation2], %s194
        // Predicated region
        $region33: #{tpu_custom_call.1} parent=31 // pred_check
          %p196 = pneg %p55
        $region34: #{tpu_custom_call.1} parent=31 // pred_check_branch
          %198 = sbr.rel (%p196) target = $region36
        $region35: #{tpu_custom_call.1} parent=31 // pred_region
          %199 = dma.done %s192, 64
        $region36: #{tpu_custom_call.1} parent=31 // pred_fallthru
          _
        %s200 = sand.u32 %s42, 1
        %s201 = scalar_lea.sflag [#allocation3], %s200
        %s202 = sand.u32 %s42, 1
        %s203 = smul.addr %s202, 4
        %s204 = scalar_lea.vmem [#allocation2], %s203
        %p205 = pneg %p55
        %p206 = pneg %p52
        %p207 = scmp.lt.s32.totalorder %s24, 1
        %s208 = scalar_select %p207, %s24, 1
        %p209 = scmp.lt.s32.totalorder %s25, 1
        %s210 = scalar_select %p209, %s25, 1
        %s211 = smul.addr %s208, 2
        %s212 = sadd.s32 %s210, %s211
        %s213 = scalar_lea.vmem %s1, %s212
        %p214 = pneg %p83
        %p215 = pneg %p80
        %p216 = pneg %p104
        %p217 = pneg %p101
        %p218 = pneg %p132
        %p219 = pneg %p129
        %s220 = sand.u32 %s119, 1
        %s221 = scalar_lea.sflag [#allocation4], %s220
        %s222 = sand.u32 %s119, 1
        %s223 = scalar_lea.vmem [#allocation5], %s222
        %p224 = scmp.lt.s32.totalorder %s24, 1
        %s225 = scalar_select %p224, %s24, 1
        %p226 = scmp.lt.s32.totalorder %s25, 1
        %s227 = scalar_select %p226, %s25, 1
        %s228 = smul.addr %s225, 2
        %s229 = sadd.s32 %s227, %s228
        %s230 = scalar_lea.vmem %s1, %s229
        %v231 = vlaneseq
        %v232 = vand.u32 %v231, 127
        %s233 = smul.u32 %s25, 128
        %v234 = vstv %s233
        %v235 = vadd.s32 %v234, %v232
        %vm236 = vcmp.lt.s32.totalorder %v235, 256
        %v237 = vld [vmem:[%s195] sm:$0xf]
        %v238 = vld [vmem:[%s230] sm:$0x1]
        %v239 = vld [vmem:[%s2] sm:$0xf]
        %vm240 = vcmask 1043456
        %v241 = vsel %vm240, %v237, -inf
        %v242 = vrot.slane %v241, 4
        %v243 = vmax.f32 %v241, %v242
        %v244 = vrot.slane %v243, 2
        %v245 = vmax.f32 %v243, %v244
        %v246 = vrot.slane %v245, 1
        %v247 = vmax.f32 %v245, %v246
        %v248 = vsub.f32 %v237, %v247
        %v249 = vmul.f32 %v248, 1.442695
        %v250 = vpow.pop %v249
        %v251 = vsel %vm240, %v250, 0.0
        %v252 = vrot.slane %v251, 4
        %v253 = vadd.f32 %v251, %v252
        %v254 = vrot.slane %v253, 2
        %v255 = vadd.f32 %v253, %v254
        %v256 = vrot.slane %v255, 1
        %v257 = vadd.f32 %v255, %v256
        %v258 = vlaneseq
        %v259 = vshrl.u32 %v258, 7
        %v260 = vlaneseq
        %v261 = vshrl.u32 %v260, 7
        %v262 = vsub.s32 0, %v261
        %v263 = vrot.slane %v238, %v262
        %vm264 = vcmp.eq.s32.totalorder %v259, %v263
        %v265 = vsel %vm236, 1, 0
        %vm266 = vcmp.eq.s32.totalorder %v265, 1
        %vm267 = vmand %vm264, %vm266
        %v268 = vsel %vm267, %v248, 0.0
        %v269 = vsel %vm240, %v268, 0.0
        %v270 = vrot.slane %v269, 4
        %v271 = vadd.f32 %v269, %v270
        %v272 = vrot.slane %v271, 2
        %v273 = vadd.f32 %v271, %v272
        %v274 = vrot.slane %v273, 1
        %v275 = vadd.f32 %v273, %v274
        %v276 = vsel %vm267, %v250, 0.0
        %v277 = vsel %vm240, %v276, 0.0
        %v278 = vrot.slane %v277, 4
        %v279 = vadd.f32 %v277, %v278
        %v280 = vrot.slane %v279, 2
        %v281 = vadd.f32 %v279, %v280
        %v282 = vrot.slane %v281, 1
        %v283 = vadd.f32 %v281, %v282
        %285 = vset.pattern.permute.xlu0 0
        %286 = vperm.xlu0 %285, %v239
        %v287 = vpop.permute.xlu0 %286
        %v289 = vsel %vm267, %v287, 0.0
        %v290 = vsel %vm240, %v289, 0.0
        %v291 = vrot.slane %v290, 4
        %v292 = vadd.f32 %v290, %v291
        %v293 = vrot.slane %v292, 2
        %v294 = vadd.f32 %v292, %v293
        %v295 = vrot.slane %v294, 1
        %v296 = vadd.f32 %v294, %v295
        %v297 = vlog2.pop %v257
        %v298 = vmul.f32 %v297, 0.6931472
        %v299 = vsub.f32 %v275, %v298
        %v300 = vrcp.pop %v257
        %v301 = vmul.f32 %v283, %v300
        %v302 = vsub.f32 1.0, %v301
        %v303 = vmax.f32 %v302, 0.0
        %v304 = vmul.f32 %v303, %v303
        %v305 = vsub.f32 0.0, %v296
        %v306 = vmul.f32 %v305, %v304
        %v307 = vmul.f32 %v306, %v299
        %v308 = vsel %vm236, %v307, 0.0
        %vm309 = vcmask 1040384
        %v310 = vsel %vm309, %v308, 0.0
        %311 = vadd.xlane.f32.xlu0 %v310
        %v312 = vpop.xlane.xlu0 %311
        %v313 = vrot.slane %v312, 4
        %v314 = vadd.f32 %v312, %v313
        %v315 = vrot.slane %v314, 2
        %v316 = vadd.f32 %v314, %v315
        %v317 = vrot.slane %v316, 1
        %v318 = vadd.f32 %v316, %v317
        %s319 = vtos %v318
        %vm320 = vcmp.eq.s32.totalorder %v232, 0
        %v321 = vstv %s319
        %v322 = vsel %vm320, %v321, 0.0
        %323 = vst [vmem:[%s223] sm:$0x1] %v322
        %s324 = sand.u32 %s119, 1
        %s325 = scalar_lea.sflag [#allocation4], %s324
        %s326 = sand.u32 %s119, 1
        %s327 = scalar_lea.vmem [#allocation5], %s326
        // Predicated region
        $region37: #{tpu_custom_call.1} parent=31 // pred_check
          %p328 = pneg %p129
        $region38: #{tpu_custom_call.1} parent=31 // pred_check_branch
          %330 = sbr.rel (%p328) target = $region40
        $region39: #{tpu_custom_call.1} parent=31 // pred_region
          %s332 = ssub.s32 16, 16
          %333 = vsyncadd %s325, %s332
          %s334 = smul.addr %s24, 2
          %s335 = sadd.s32 %s25, %s334
          %s336 = smul.addr %s335, 16
          %s337 = scalar_lea.hbm %s3, %s336
          %s339 = sshll.u32 %s327, 4
          %s340 = int_to_ptr.vmem [resolvable:$true] %s339
          %342 = dma.vmem_to_hbm [thread:$0]  %s340, 16, %s337, %s325
        $region40: #{tpu_custom_call.1} parent=31 // pred_fallthru
          _
      $region32: #{tpu_custom_call.1} parent=5 // pred_fallthru
        _
      %p343 = scmp.le.s32.totalorder 2, %s15
      // Predicated region
      $region41: #{tpu_custom_call.1} parent=5 // pred_check
        %p344 = pneg %p343
      $region42: #{tpu_custom_call.1} parent=5 // pred_check_branch
        %346 = sbr.rel (%p344) target = $region44
      $region43: #{tpu_custom_call.1} parent=5 // pred_region
        %s347 = ssub.s32 %s15, 2
        // Predicated region
        $region45: #{tpu_custom_call.1} parent=43 // pred_check
          %p348 = pneg %p135
        $region46: #{tpu_custom_call.1} parent=43 // pred_check_branch
          %350 = sbr.rel (%p348) target = $region48
        $region47: #{tpu_custom_call.1} parent=43 // pred_region
          %s351 = sand.u32 %s120, 1
          %s352 = scalar_lea.sflag [#allocation4], %s351
          %s353 = sand.u32 %s120, 1
          %s354 = scalar_lea.vmem [#allocation5], %s353
          %355 = dma.done %s352, 16
        $region48: #{tpu_custom_call.1} parent=43 // pred_fallthru
          _
      $region44: #{tpu_custom_call.1} parent=5 // pred_fallthru
        _
    $region6: #{tpu_custom_call.1} parent=1 // loop_footer
      %s19 = sadd.s32 1, %s15
    $region7: #{tpu_custom_call.1} parent=1 // loop_footer_branch
      %14 = sbr.rel target = $region3
    $region8: #{tpu_custom_call.1} parent=1 // loop_exit
      _
    %356 = vsyncpa [#allocation3], 1
    %s357 = scalar_lea.sflag [#allocation3], 1
    %358 = vsyncpa %s357, 1
    %359 = vsyncpa [#allocation4], 1
    %s360 = scalar_lea.sflag [#allocation4], 1
    %361 = vsyncpa %s360, 1

</llo_original>
